<compile_context>
chip_gen: v6e
topology: v6e:2x2x1
jax: 0.10.0
libtpu: 0.0.40
codegen_flags: <defaults>
</compile_context>

<pallas_src>
import functools

import jax
import jax.numpy as jnp
import numpy as np
from jax.experimental import pallas as pl
from jax.experimental.pallas import tpu as pltpu


def _resblock_kernel(x_ref, mask_ref, w0_ref, b0_ref, w1_ref, b1_ref, a_ref,
                     out_ref, *, wp, res_scale):
    """One image per grid step, flat lane-dense canvas layout.

    x_ref   : (1, C, L) f32  zero-padded image canvas, flattened (Hp*Wp then
                             zero-padded up to L, a multiple of 128)
    mask_ref: (1, L)    f32  1.0 inside the real HxW image, 0.0 on the ring/pad
    w0_ref  : (Cm, 9*C) f32  conv0 weights, columns ordered (ky, kx, cin)
    b0_ref  : (Cm, 1)   f32
    w1_ref  : (C, 9*Cm) f32  conv1 weights
    b1_ref  : (C, 1)    f32
    a_ref   : (1, 1)    f32  PReLU slope (num_parameters=1)
    out_ref : (1, C, L) f32  output canvas (real region extracted by the wrapper)
    """
    x = x_ref[0]                                      # (C, L) f32
    L = x.shape[-1]

    def conv3x3(act, w_slab, bias):
        # 9 taps = lane rolls of the flat canvas (dy -> +-wp, dx -> +-1),
        # stacked on the sublane axis -> one MXU matmul with lane-dense N = L.
        taps = []
        for dy in (-1, 0, 1):
            for dx in (-1, 0, 1):
                off = dy * wp + dx
                taps.append(act if off == 0
                            else pltpu.roll(act, (-off) % L, axis=1))
        p = jnp.concatenate(taps, axis=0)             # (9*Cin, L)
        return jnp.dot(w_slab, p, preferred_element_type=jnp.float32) + bias

    # conv0 + PReLU (scalar slope), computed on the whole canvas.
    z0 = conv3x3(x, w0_ref[...], b0_ref[...])         # (Cm, L)
    feat = jnp.where(z0 >= 0.0, z0, a_ref[...] * z0)
    # conv1 zero-pads its input: zero everything outside the real HxW image
    # (also kills roll wrap-around garbage in the canvas padding).
    feat = feat * mask_ref[...]

    # conv1 (no act/norm) + residual.
    y1 = conv3x3(feat, w1_ref[...], b1_ref[...])      # (C, L)
    res = y1 if res_scale == 1.0 else res_scale * y1
    out_ref[0] = x + res


def resblock(x_nchw, params, *, res_scale=1.0):
    """NCHW in / NCHW out; weights in PyTorch OIHW layout."""
    w0, b0, w1, b1, a0 = (params[k] for k in ("w0", "b0", "w1", "b1", "a0"))
    N, C, H, W = x_nchw.shape
    Cm = w0.shape[0]

    Hp, Wp = H + 2, W + 2                      # 1-px zero ring (conv padding)
    L0 = Hp * Wp
    L = ((L0 + 127) // 128) * 128              # lane-dense flat canvas length

    x = x_nchw.astype(jnp.float32)
    xp = jnp.pad(x, ((0, 0), (0, 0), (1, 1), (1, 1)))            # (N, C, Hp, Wp)
    xf = jnp.pad(xp.reshape(N, C, L0), ((0, 0), (0, 0), (0, L - L0)))  # (N, C, L)

    # Static interior mask (1 inside the real image, 0 on ring / end padding).
    mask_np = np.zeros((Hp, Wp), np.float32)
    mask_np[1:1 + H, 1:1 + W] = 1.0
    mask = jnp.asarray(np.pad(mask_np.reshape(1, L0), ((0, 0), (0, L - L0))))

    # Weight slabs: columns ordered (ky, kx, cin) to match the tap stacking order.
    w0s = jnp.transpose(w0, (0, 2, 3, 1)).reshape(Cm, 9 * C).astype(jnp.float32)
    w1s = jnp.transpose(w1, (0, 2, 3, 1)).reshape(C, 9 * Cm).astype(jnp.float32)

    kernel = functools.partial(_resblock_kernel, wp=Wp,
                               res_scale=float(res_scale))
    out_flat = pl.pallas_call(
        kernel,
        out_shape=jax.ShapeDtypeStruct((N, C, L), jnp.float32),
        grid=(N,),
        in_specs=[
            pl.BlockSpec((1, C, L), lambda n: (n, 0, 0)),
            pl.BlockSpec((1, L), lambda n: (0, 0)),
            pl.BlockSpec((Cm, 9 * C), lambda n: (0, 0)),
            pl.BlockSpec((Cm, 1), lambda n: (0, 0)),
            pl.BlockSpec((C, 9 * Cm), lambda n: (0, 0)),
            pl.BlockSpec((C, 1), lambda n: (0, 0)),
            pl.BlockSpec((1, 1), lambda n: (0, 0)),
        ],
        out_specs=pl.BlockSpec((1, C, L), lambda n: (n, 0, 0)),
        compiler_params=pltpu.CompilerParams(
            dimension_semantics=("parallel",)),
    )(xf, mask, w0s, b0.reshape(Cm, 1).astype(jnp.float32),
      w1s, b1.reshape(C, 1).astype(jnp.float32),
      a0.reshape(1, 1).astype(jnp.float32))

    out = out_flat[:, :, :L0].reshape(N, C, Hp, Wp)[:, :, 1:1 + H, 1:1 + W]
    return out


def init_params(key, c_in, c_mid, k=3):
    """Deterministic synthetic parameters with PyTorch layouts / PReLU init."""
    ks = jax.random.split(key, 4)
    s = 0.1
    return dict(
        w0=s * jax.random.normal(ks[0], (c_mid, c_in, k, k), jnp.float32),  # OIHW
        b0=s * jax.random.normal(ks[1], (c_mid,), jnp.float32),
        w1=s * jax.random.normal(ks[2], (c_in, c_mid, k, k), jnp.float32),  # OIHW
        b1=s * jax.random.normal(ks[3], (c_in,), jnp.float32),
        a0=jnp.full((1,), 0.2, jnp.float32),   # PReLU(num_parameters=1, init=0.2)
    )


# ---- pure-JAX reference (XLA convs, f32) for a correctness check ------------
def _conv_ref(x, w, b, pad):
    y = jax.lax.conv_general_dilated(
        x, w, window_strides=(1, 1), padding=[(pad, pad), (pad, pad)],
        dimension_numbers=('NCHW', 'OIHW', 'NCHW'))
    return y + b[None, :, None, None]


def resblock_ref(x, p, res_scale=1.0):
    y = _conv_ref(x, p["w0"], p["b0"], 1)
    y = jnp.where(y >= 0, y, p["a0"] * y)          # PReLU, shared scalar slope
    y = _conv_ref(y, p["w1"], p["b1"], 1)
    return x + res_scale * y


if __name__ == "__main__":
    key = jax.random.PRNGKey(0)
    kx, kp = jax.random.split(key)
    N, C, Cm, H, W = 2, 8, 16, 16, 16          # in_channel == out_channel == 8
    x = jax.random.normal(kx, (N, C, H, W), jnp.float32)
    params = init_params(kp, C, Cm)

    out = jax.block_until_ready(resblock(x, params))
    ref = jax.block_until_ready(resblock_ref(x, params))
    # f32 MXU operands + f32 accumulation -> tight tolerance vs f32 reference.
    np.testing.assert_allclose(np.asarray(out), np.asarray(ref),
                               rtol=1e-3, atol=1e-3)
    print("KERNEL_OK")
</pallas_src>

<mosaic_0001>
module attributes {stable_mosaic.version = 11 : i64} {
  func.func @_resblock_kernel(%arg0: i32, %arg1: memref<1x8x384xf32, #tpu.memory_space<vmem>>, %arg2: memref<1x384xf32, #tpu.memory_space<vmem>>, %arg3: memref<16x72xf32, #tpu.memory_space<vmem>>, %arg4: memref<16x1xf32, #tpu.memory_space<vmem>>, %arg5: memref<8x144xf32, #tpu.memory_space<vmem>>, %arg6: memref<8x1xf32, #tpu.memory_space<vmem>>, %arg7: memref<1x1xf32, #tpu.memory_space<vmem>>, %arg8: memref<1x8x384xf32, #tpu.memory_space<vmem>>) attributes {dimension_semantics = [#tpu.dimension_semantics<parallel>], iteration_bounds = array<i64: 2>, scalar_prefetch = 0 : i64, scratch_operands = 0 : i64, tpu.core_type = #tpu.core_type<tc>, window_params = [{transform_indices = @transform_0, window_bounds = array<i64: 1, 8, 384>}, {pipeline_mode = #tpu.pipeline_mode<synchronous>, transform_indices = @transform_1, window_bounds = array<i64: 1, 384>}, {pipeline_mode = #tpu.pipeline_mode<synchronous>, transform_indices = @transform_2, window_bounds = array<i64: 16, 72>}, {pipeline_mode = #tpu.pipeline_mode<synchronous>, transform_indices = @transform_3, window_bounds = array<i64: 16, 1>}, {pipeline_mode = #tpu.pipeline_mode<synchronous>, transform_indices = @transform_4, window_bounds = array<i64: 8, 144>}, {pipeline_mode = #tpu.pipeline_mode<synchronous>, transform_indices = @transform_5, window_bounds = array<i64: 8, 1>}, {pipeline_mode = #tpu.pipeline_mode<synchronous>, transform_indices = @transform_6, window_bounds = array<i64: 1, 1>}, {transform_indices = @transform_7, window_bounds = array<i64: 1, 8, 384>}]} {
    %c0 = arith.constant 0 : index
    %c0_0 = arith.constant 0 : index
    %c0_1 = arith.constant 0 : index
    %0 = vector.load %arg1[%c0, %c0_0, %c0_1] : memref<1x8x384xf32, #tpu.memory_space<vmem>>, vector<1x8x384xf32>
    %1 = vector.shape_cast %0 : vector<1x8x384xf32> to vector<8x384xf32>
    %c0_2 = arith.constant 0 : index
    %c0_3 = arith.constant 0 : index
    %2 = vector.load %arg3[%c0_2, %c0_3] : memref<16x72xf32, #tpu.memory_space<vmem>>, vector<16x72xf32>
    %c0_4 = arith.constant 0 : index
    %c0_5 = arith.constant 0 : index
    %3 = vector.load %arg4[%c0_4, %c0_5] : memref<16x1xf32, #tpu.memory_space<vmem>>, vector<16x1xf32>
    %c19_i32 = arith.constant 19 : i32
    %4 = tpu.dynamic_rotate %1 by %c19_i32 dim 1 : vector<8x384xf32>, i32 -> vector<8x384xf32>
    %c18_i32 = arith.constant 18 : i32
    %5 = tpu.dynamic_rotate %1 by %c18_i32 dim 1 : vector<8x384xf32>, i32 -> vector<8x384xf32>
    %c17_i32 = arith.constant 17 : i32
    %6 = tpu.dynamic_rotate %1 by %c17_i32 dim 1 : vector<8x384xf32>, i32 -> vector<8x384xf32>
    %c1_i32 = arith.constant 1 : i32
    %7 = tpu.dynamic_rotate %1 by %c1_i32 dim 1 : vector<8x384xf32>, i32 -> vector<8x384xf32>
    %c383_i32 = arith.constant 383 : i32
    %8 = tpu.dynamic_rotate %1 by %c383_i32 dim 1 : vector<8x384xf32>, i32 -> vector<8x384xf32>
    %c367_i32 = arith.constant 367 : i32
    %9 = tpu.dynamic_rotate %1 by %c367_i32 dim 1 : vector<8x384xf32>, i32 -> vector<8x384xf32>
    %c366_i32 = arith.constant 366 : i32
    %10 = tpu.dynamic_rotate %1 by %c366_i32 dim 1 : vector<8x384xf32>, i32 -> vector<8x384xf32>
    %c365_i32 = arith.constant 365 : i32
    %11 = tpu.dynamic_rotate %1 by %c365_i32 dim 1 : vector<8x384xf32>, i32 -> vector<8x384xf32>
    %12 = tpu.concatenate %4, %5, %6, %7, %1, %8, %9, %10, %11 in 0 : vector<8x384xf32>, vector<8x384xf32>, vector<8x384xf32>, vector<8x384xf32>, vector<8x384xf32>, vector<8x384xf32>, vector<8x384xf32>, vector<8x384xf32>, vector<8x384xf32> -> vector<72x384xf32>
    %cst = arith.constant dense<0.000000e+00> : vector<16x384xf32>
    %13 = tpu.matmul %2, %12, %cst {dimension_numbers = #tpu.dot_dimension_numbers<[1], [0], [0], [1], [0, 0, 1, 1], [], []>} : vector<16x72xf32>, vector<72x384xf32>, vector<16x384xf32> -> vector<16x384xf32>
    %14 = vector.broadcast %3 : vector<16x1xf32> to vector<16x384xf32>
    %15 = arith.addf %13, %14 : vector<16x384xf32>
    %cst_6 = arith.constant 0.000000e+00 : f32
    %16 = vector.broadcast %cst_6 : f32 to vector<16x384xf32>
    %17 = arith.cmpf oge, %15, %16 : vector<16x384xf32>
    %c0_7 = arith.constant 0 : index
    %c0_8 = arith.constant 0 : index
    %18 = vector.load %arg7[%c0_7, %c0_8] : memref<1x1xf32, #tpu.memory_space<vmem>>, vector<1x1xf32>
    %19 = vector.broadcast %18 : vector<1x1xf32> to vector<16x384xf32>
    %20 = arith.mulf %19, %15 : vector<16x384xf32>
    %21 = arith.select %17, %15, %20 : vector<16x384xi1>, vector<16x384xf32>
    %c0_9 = arith.constant 0 : index
    %c0_10 = arith.constant 0 : index
    %22 = vector.load %arg2[%c0_9, %c0_10] : memref<1x384xf32, #tpu.memory_space<vmem>>, vector<1x384xf32>
    %23 = vector.broadcast %22 : vector<1x384xf32> to vector<16x384xf32>
    %24 = arith.mulf %21, %23 : vector<16x384xf32>
    %c0_11 = arith.constant 0 : index
    %c0_12 = arith.constant 0 : index
    %25 = vector.load %arg5[%c0_11, %c0_12] : memref<8x144xf32, #tpu.memory_space<vmem>>, vector<8x144xf32>
    %c0_13 = arith.constant 0 : index
    %c0_14 = arith.constant 0 : index
    %26 = vector.load %arg6[%c0_13, %c0_14] : memref<8x1xf32, #tpu.memory_space<vmem>>, vector<8x1xf32>
    %c19_i32_15 = arith.constant 19 : i32
    %27 = tpu.dynamic_rotate %24 by %c19_i32_15 dim 1 : vector<16x384xf32>, i32 -> vector<16x384xf32>
    %c18_i32_16 = arith.constant 18 : i32
    %28 = tpu.dynamic_rotate %24 by %c18_i32_16 dim 1 : vector<16x384xf32>, i32 -> vector<16x384xf32>
    %c17_i32_17 = arith.constant 17 : i32
    %29 = tpu.dynamic_rotate %24 by %c17_i32_17 dim 1 : vector<16x384xf32>, i32 -> vector<16x384xf32>
    %c1_i32_18 = arith.constant 1 : i32
    %30 = tpu.dynamic_rotate %24 by %c1_i32_18 dim 1 : vector<16x384xf32>, i32 -> vector<16x384xf32>
    %c383_i32_19 = arith.constant 383 : i32
    %31 = tpu.dynamic_rotate %24 by %c383_i32_19 dim 1 : vector<16x384xf32>, i32 -> vector<16x384xf32>
    %c367_i32_20 = arith.constant 367 : i32
    %32 = tpu.dynamic_rotate %24 by %c367_i32_20 dim 1 : vector<16x384xf32>, i32 -> vector<16x384xf32>
    %c366_i32_21 = arith.constant 366 : i32
    %33 = tpu.dynamic_rotate %24 by %c366_i32_21 dim 1 : vector<16x384xf32>, i32 -> vector<16x384xf32>
    %c365_i32_22 = arith.constant 365 : i32
    %34 = tpu.dynamic_rotate %24 by %c365_i32_22 dim 1 : vector<16x384xf32>, i32 -> vector<16x384xf32>
    %35 = tpu.concatenate %27, %28, %29, %30, %24, %31, %32, %33, %34 in 0 : vector<16x384xf32>, vector<16x384xf32>, vector<16x384xf32>, vector<16x384xf32>, vector<16x384xf32>, vector<16x384xf32>, vector<16x384xf32>, vector<16x384xf32>, vector<16x384xf32> -> vector<144x384xf32>
    %cst_23 = arith.constant dense<0.000000e+00> : vector<8x384xf32>
    %36 = tpu.matmul %25, %35, %cst_23 {dimension_numbers = #tpu.dot_dimension_numbers<[1], [0], [0], [1], [0, 0, 1, 1], [], []>} : vector<8x144xf32>, vector<144x384xf32>, vector<8x384xf32> -> vector<8x384xf32>
    %37 = vector.broadcast %26 : vector<8x1xf32> to vector<8x384xf32>
    %38 = arith.addf %36, %37 : vector<8x384xf32>
    %39 = arith.addf %1, %38 : vector<8x384xf32>
    %c0_24 = arith.constant 0 : index
    %c0_25 = arith.constant 0 : index
    %c0_26 = arith.constant 0 : index
    %40 = vector.load %arg8[%c0_24, %c0_25, %c0_26] : memref<1x8x384xf32, #tpu.memory_space<vmem>>, vector<1x8x384xf32>
    %41 = vector.shape_cast %40 : vector<1x8x384xf32> to vector<8x384xf32>
    %42 = vector.shape_cast %39 : vector<8x384xf32> to vector<1x8x384xf32>
    tpu.vector_store %arg8[%c0_24, %c0_25, %c0_26], %42 {strides = array<i32>} : memref<1x8x384xf32, #tpu.memory_space<vmem>>, vector<1x8x384xf32>,
    return
  }
  func.func @transform_0(%arg0: i32) -> (i32, i32, i32) {
    %c0_i32 = arith.constant 0 : i32
    %c0_i32_0 = arith.constant 0 : i32
    %c0_i32_1 = arith.constant 0 : i32
    return %arg0, %c0_i32, %c0_i32_0 : i32, i32, i32
  }
  func.func @transform_1(%arg0: i32) -> (i32, i32) {
    %c0_i32 = arith.constant 0 : i32
    %c0_i32_0 = arith.constant 0 : i32
    %c0_i32_1 = arith.constant 0 : i32
    return %c0_i32, %c0_i32_0 : i32, i32
  }
  func.func @transform_2(%arg0: i32) -> (i32, i32) {
    %c0_i32 = arith.constant 0 : i32
    %c0_i32_0 = arith.constant 0 : i32
    %c0_i32_1 = arith.constant 0 : i32
    return %c0_i32, %c0_i32_0 : i32, i32
  }
  func.func @transform_3(%arg0: i32) -> (i32, i32) {
    %c0_i32 = arith.constant 0 : i32
    %c0_i32_0 = arith.constant 0 : i32
    %c0_i32_1 = arith.constant 0 : i32
    return %c0_i32, %c0_i32_0 : i32, i32
  }
  func.func @transform_4(%arg0: i32) -> (i32, i32) {
    %c0_i32 = arith.constant 0 : i32
    %c0_i32_0 = arith.constant 0 : i32
    %c0_i32_1 = arith.constant 0 : i32
    return %c0_i32, %c0_i32_0 : i32, i32
  }
  func.func @transform_5(%arg0: i32) -> (i32, i32) {
    %c0_i32 = arith.constant 0 : i32
    %c0_i32_0 = arith.constant 0 : i32
    %c0_i32_1 = arith.constant 0 : i32
    return %c0_i32, %c0_i32_0 : i32, i32
  }
  func.func @transform_6(%arg0: i32) -> (i32, i32) {
    %c0_i32 = arith.constant 0 : i32
    %c0_i32_0 = arith.constant 0 : i32
    %c0_i32_1 = arith.constant 0 : i32
    return %c0_i32, %c0_i32_0 : i32, i32
  }
  func.func @transform_7(%arg0: i32) -> (i32, i32, i32) {
    %c0_i32 = arith.constant 0 : i32
    %c0_i32_0 = arith.constant 0 : i32
    %c0_i32_1 = arith.constant 0 : i32
    return %arg0, %c0_i32, %c0_i32_0 : i32, i32, i32
  }
}

</mosaic_0001>

<llo_original>
// kernel: tpu_custom_call.1
$region0: #{tpu_custom_call.1}
  #allocation0 [shape = 'u32[]', space=smem, size = 0x4, offset = 0x4, fixed_abs, tag = 'smem constant byte address 0x4 - core index']
  #allocation1 [shape = 'u32[144,128]{1,0:T(1,128)}', space=vmem, size = 0x12000, scoped, tag = 'internal scratch']
  #allocation2 [shape = 'f32[1,1]{1,0:T(1,128)S(1)}', space=vmem, size = 0x200, scoped, tag = 'scoped memory for tpu_custom_call.1']
  %s0 = inlined_call_operand.hbm [shape: f32[2,8,384], index: 0, kind: input, shape index: {}]
  %s1 = inlined_call_operand.hbm [shape: f32[1,384], index: 1, kind: input, shape index: {}]
  %s2 = inlined_call_operand.vmem [shape: f32[16,72], index: 2, kind: input, shape index: {}]
  %s3 = inlined_call_operand.vmem [shape: f32[16,1], index: 3, kind: input, shape index: {}]
  %s4 = inlined_call_operand.vmem [shape: f32[8,144], index: 4, kind: input, shape index: {}]
  %s5 = inlined_call_operand.vmem [shape: f32[8,1], index: 5, kind: input, shape index: {}]
  %s6 = inlined_call_operand.<no memory space> [shape: f32[1,1], index: 6, kind: input, shape index: {}]
  %s7 = inlined_call_operand.hbm [shape: f32[2,8,384], index: 7, kind: output, shape index: {}]
  %s8 = sld [smem:[#allocation0]]
  $region69: #{tpu_custom_call.1} parent=0
    _
  %s10 = ssub.s32 1, %s8
  %s11 = scalar_select 0, %s10, %s8
  %v12 = vstv %s6
  %13 = vst [vmem:[#allocation2] sm:$0x1] %v12
  $region1: #{tpu_custom_call.1} parent=0
    #allocation3 [shape = 'u8[24576]{0}', space=vmem, size = 0x6000, scoped, tag = 'input window, operand 0']
    #allocation4 [shape = 's32[2]{0}', space=sflag, size = 0x8, scoped, tag = 'scoped memory for tpu_custom_call.1']
    #allocation5 [shape = 's32[2]{0}', space=sflag, size = 0x8, scoped, tag = 'scoped memory for tpu_custom_call.1']
    #allocation6 [shape = 'u8[1536]{0}', space=vmem, size = 0x800, scoped, tag = 'input window, operand 1, single buffered']
    #allocation7 [shape = 's32[1]{0}', space=sflag, size = 0x4, scoped, tag = 'scoped memory for tpu_custom_call.1']
    #allocation8 [shape = 'u8[24576]{0}', space=vmem, size = 0x6000, scoped, tag = 'output window, operand 0']
    %14 = vsyncpa [#allocation4], 0
    %s15 = scalar_lea.sflag [#allocation4], 1
    %16 = vsyncpa %s15, 0
    %17 = vsyncpa [#allocation7], 0
    %18 = vsyncpa [#allocation5], 0
    %s19 = scalar_lea.sflag [#allocation5], 1
    %20 = vsyncpa %s19, 0
    loop: start=0, step=1, limit=4
    $region2: #{tpu_custom_call.1} parent=1 // loop_pre_header
      _
    $region3: #{tpu_custom_call.1} parent=1 // loop_header
      %s22 = sphi 0, %s26
      %p23 = scmp.ge.s32.totalorder %s22, 4
      %s32 = sphi 0, %s34
      %s35 = sphi 0, %s32
      %s36 = sphi 0, %s35
      %s52 = sphi 0, %s36
      %s56 = sphi 0, %s56
      %s58 = sphi 0, %s56
      %s59 = sphi 0, %s58
      %s73 = sphi 0, %s59
      %s77 = sphi 0, %s77
      %s79 = sphi 0, %s77
      %s80 = sphi 0, %s79
      %s94 = sphi 0, %s80
      %s98 = sphi 0, %s98
      %s100 = sphi 0, %s98
      %s101 = sphi 0, %s100
      %s115 = sphi 0, %s101
      %s119 = sphi 0, %s119
      %s121 = sphi 0, %s119
      %s122 = sphi 0, %s121
      %s136 = sphi 0, %s122
      %s140 = sphi 0, %s140
      %s142 = sphi 0, %s140
      %s143 = sphi 0, %s142
      %s157 = sphi 0, %s143
      %s161 = sphi 0, %s161
      %s163 = sphi 0, %s161
      %s164 = sphi 0, %s163
      %s178 = sphi 0, %s164
      %s184 = sphi 0, %s186
      %s187 = sphi 0, %s184
      %s188 = sphi 0, %s187
      %s204 = sphi 0, %s188
    $region4: #{tpu_custom_call.1} parent=1 // loop_header_branch
      %25 = sbr.rel (%p23) target = $region8
    $region5: #{tpu_custom_call.1} parent=1 // loop_body
      %s27 = ssub.s32 %s22, 1
      %s28 = ssub.s32 %s22, 2
      %s29 = sadd.s32 %s22, 1
      %s30 = ssub.s32 %s22, %s29
      %p31 = scmp.eq.s32.totalorder %s30, 0
      %s33 = sadd.s32 %s32, 1
      %s34 = scalar_select %p31, %s32, %s33
      %p37 = pneg %p31
      %p38 = scmp.eq.s32.totalorder %s22, 1
      %p39 = por %p37, %p38
      %p40 = scmp.ne.s32.totalorder %s32, %s35
      %p41 = scmp.eq.s32.totalorder %s22, 0
      %p42 = por %p40, %p41
      %p43 = scmp.ne.s32.totalorder %s32, %s35
      %p44 = scmp.eq.s32.totalorder %s27, 1
      %p45 = por %p43, %p44
      %p46 = scmp.ne.s32.totalorder %s35, %s36
      %p47 = scmp.eq.s32.totalorder %s27, 0
      %p48 = por %p46, %p47
      %p49 = scmp.ne.s32.totalorder %s35, %s36
      %p50 = scmp.eq.s32.totalorder %s28, 1
      %p51 = por %p49, %p50
      %p53 = scmp.ne.s32.totalorder %s36, %s52
      %p54 = scmp.eq.s32.totalorder %s28, 0
      %p55 = por %p53, %p54
      %s57 = sadd.s32 %s56, 1
      %p60 = scmp.eq.s32.totalorder %s22, 1
      %p61 = scmp.ne.s32.totalorder %s56, %s58
      %p62 = scmp.eq.s32.totalorder %s22, 0
      %p63 = por %p61, %p62
      %p64 = scmp.ne.s32.totalorder %s56, %s58
      %p65 = scmp.eq.s32.totalorder %s27, 1
      %p66 = por %p64, %p65
      %p67 = scmp.ne.s32.totalorder %s58, %s59
      %p68 = scmp.eq.s32.totalorder %s27, 0
      %p69 = por %p67, %p68
      %p70 = scmp.ne.s32.totalorder %s58, %s59
      %p71 = scmp.eq.s32.totalorder %s28, 1
      %p72 = por %p70, %p71
      %p74 = scmp.ne.s32.totalorder %s59, %s73
      %p75 = scmp.eq.s32.totalorder %s28, 0
      %p76 = por %p74, %p75
      %s78 = sadd.s32 %s77, 1
      %p81 = scmp.eq.s32.totalorder %s22, 1
      %p82 = scmp.ne.s32.totalorder %s77, %s79
      %p83 = scmp.eq.s32.totalorder %s22, 0
      %p84 = por %p82, %p83
      %p85 = scmp.ne.s32.totalorder %s77, %s79
      %p86 = scmp.eq.s32.totalorder %s27, 1
      %p87 = por %p85, %p86
      %p88 = scmp.ne.s32.totalorder %s79, %s80
      %p89 = scmp.eq.s32.totalorder %s27, 0
      %p90 = por %p88, %p89
      %p91 = scmp.ne.s32.totalorder %s79, %s80
      %p92 = scmp.eq.s32.totalorder %s28, 1
      %p93 = por %p91, %p92
      %p95 = scmp.ne.s32.totalorder %s80, %s94
      %p96 = scmp.eq.s32.totalorder %s28, 0
      %p97 = por %p95, %p96
      %s99 = sadd.s32 %s98, 1
      %p102 = scmp.eq.s32.totalorder %s22, 1
      %p103 = scmp.ne.s32.totalorder %s98, %s100
      %p104 = scmp.eq.s32.totalorder %s22, 0
      %p105 = por %p103, %p104
      %p106 = scmp.ne.s32.totalorder %s98, %s100
      %p107 = scmp.eq.s32.totalorder %s27, 1
      %p108 = por %p106, %p107
      %p109 = scmp.ne.s32.totalorder %s100, %s101
      %p110 = scmp.eq.s32.totalorder %s27, 0
      %p111 = por %p109, %p110
      %p112 = scmp.ne.s32.totalorder %s100, %s101
      %p113 = scmp.eq.s32.totalorder %s28, 1
      %p114 = por %p112, %p113
      %p116 = scmp.ne.s32.totalorder %s101, %s115
      %p117 = scmp.eq.s32.totalorder %s28, 0
      %p118 = por %p116, %p117
      %s120 = sadd.s32 %s119, 1
      %p123 = scmp.eq.s32.totalorder %s22, 1
      %p124 = scmp.ne.s32.totalorder %s119, %s121
      %p125 = scmp.eq.s32.totalorder %s22, 0
      %p126 = por %p124, %p125
      %p127 = scmp.ne.s32.totalorder %s119, %s121
      %p128 = scmp.eq.s32.totalorder %s27, 1
      %p129 = por %p127, %p128
      %p130 = scmp.ne.s32.totalorder %s121, %s122
      %p131 = scmp.eq.s32.totalorder %s27, 0
      %p132 = por %p130, %p131
      %p133 = scmp.ne.s32.totalorder %s121, %s122
      %p134 = scmp.eq.s32.totalorder %s28, 1
      %p135 = por %p133, %p134
      %p137 = scmp.ne.s32.totalorder %s122, %s136
      %p138 = scmp.eq.s32.totalorder %s28, 0
      %p139 = por %p137, %p138
      %s141 = sadd.s32 %s140, 1
      %p144 = scmp.eq.s32.totalorder %s22, 1
      %p145 = scmp.ne.s32.totalorder %s140, %s142
      %p146 = scmp.eq.s32.totalorder %s22, 0
      %p147 = por %p145, %p146
      %p148 = scmp.ne.s32.totalorder %s140, %s142
      %p149 = scmp.eq.s32.totalorder %s27, 1
      %p150 = por %p148, %p149
      %p151 = scmp.ne.s32.totalorder %s142, %s143
      %p152 = scmp.eq.s32.totalorder %s27, 0
      %p153 = por %p151, %p152
      %p154 = scmp.ne.s32.totalorder %s142, %s143
      %p155 = scmp.eq.s32.totalorder %s28, 1
      %p156 = por %p154, %p155
      %p158 = scmp.ne.s32.totalorder %s143, %s157
      %p159 = scmp.eq.s32.totalorder %s28, 0
      %p160 = por %p158, %p159
      %s162 = sadd.s32 %s161, 1
      %p165 = scmp.eq.s32.totalorder %s22, 1
      %p166 = scmp.ne.s32.totalorder %s161, %s163
      %p167 = scmp.eq.s32.totalorder %s22, 0
      %p168 = por %p166, %p167
      %p169 = scmp.ne.s32.totalorder %s161, %s163
      %p170 = scmp.eq.s32.totalorder %s27, 1
      %p171 = por %p169, %p170
      %p172 = scmp.ne.s32.totalorder %s163, %s164
      %p173 = scmp.eq.s32.totalorder %s27, 0
      %p174 = por %p172, %p173
      %p175 = scmp.ne.s32.totalorder %s163, %s164
      %p176 = scmp.eq.s32.totalorder %s28, 1
      %p177 = por %p175, %p176
      %p179 = scmp.ne.s32.totalorder %s164, %s178
      %p180 = scmp.eq.s32.totalorder %s28, 0
      %p181 = por %p179, %p180
      %s182 = ssub.s32 %s22, %s29
      %p183 = scmp.eq.s32.totalorder %s182, 0
      %s185 = sadd.s32 %s184, 1
      %s186 = scalar_select %p183, %s184, %s185
      %p189 = pneg %p183
      %p190 = scmp.eq.s32.totalorder %s22, 1
      %p191 = por %p189, %p190
      %p192 = scmp.ne.s32.totalorder %s184, %s187
      %p193 = scmp.eq.s32.totalorder %s22, 0
      %p194 = por %p192, %p193
      %p195 = scmp.ne.s32.totalorder %s184, %s187
      %p196 = scmp.eq.s32.totalorder %s27, 1
      %p197 = por %p195, %p196
      %p198 = scmp.ne.s32.totalorder %s187, %s188
      %p199 = scmp.eq.s32.totalorder %s27, 0
      %p200 = por %p198, %p199
      %p201 = scmp.ne.s32.totalorder %s187, %s188
      %p202 = scmp.eq.s32.totalorder %s28, 1
      %p203 = por %p201, %p202
      %p205 = scmp.ne.s32.totalorder %s188, %s204
      %p206 = scmp.eq.s32.totalorder %s28, 0
      %p207 = por %p205, %p206
      %p208 = scmp.le.s32.totalorder 1, %s22
      %p209 = scmp.lt.s32.totalorder %s22, 3
      %p210 = pnand %p208, %p209
      %p211 = pneg %p210
      // Predicated region
      $region9: #{tpu_custom_call.1} parent=5 // pred_check
        _
      $region10: #{tpu_custom_call.1} parent=5 // pred_check_branch
        %213 = sbr.rel (%p210) target = $region12
      $region11: #{tpu_custom_call.1} parent=5 // pred_region
        %s214 = ssub.s32 %s22, 1
        // Predicated region
        $region13: #{tpu_custom_call.1} parent=11 // pred_check
          %p215 = pneg %p69
        $region14: #{tpu_custom_call.1} parent=11 // pred_check_branch
          %217 = sbr.rel (%p215) target = $region16
        $region15: #{tpu_custom_call.1} parent=11 // pred_region
          %s219 = ssub.s32 48, 48
          %220 = vsyncadd [#allocation7], %s219
          %s222 = sshll.u32 [#allocation6], 4
          %s223 = int_to_ptr.vmem [resolvable:$true] %s222
          %225 = dma.hbm_to_vmem [thread:$0]  %s1, 48, %s223, [#allocation7]
        $region16: #{tpu_custom_call.1} parent=11 // pred_fallthru
          _
        // Predicated region
        $region17: #{tpu_custom_call.1} parent=11 // pred_check
          %p226 = pneg %p90
        $region18: #{tpu_custom_call.1} parent=11 // pred_check_branch
          %228 = sbr.rel (%p226) target = $region20
        $region19: #{tpu_custom_call.1} parent=11 // pred_region
          _
        $region20: #{tpu_custom_call.1} parent=11 // pred_fallthru
          _
        // Predicated region
        $region21: #{tpu_custom_call.1} parent=11 // pred_check
          %p229 = pneg %p111
        $region22: #{tpu_custom_call.1} parent=11 // pred_check_branch
          %231 = sbr.rel (%p229) target = $region24
        $region23: #{tpu_custom_call.1} parent=11 // pred_region
          _
        $region24: #{tpu_custom_call.1} parent=11 // pred_fallthru
          _
        // Predicated region
        $region25: #{tpu_custom_call.1} parent=11 // pred_check
          %p232 = pneg %p132
        $region26: #{tpu_custom_call.1} parent=11 // pred_check_branch
          %234 = sbr.rel (%p232) target = $region28
        $region27: #{tpu_custom_call.1} parent=11 // pred_region
          _
        $region28: #{tpu_custom_call.1} parent=11 // pred_fallthru
          _
        // Predicated region
        $region29: #{tpu_custom_call.1} parent=11 // pred_check
          %p235 = pneg %p153
        $region30: #{tpu_custom_call.1} parent=11 // pred_check_branch
          %237 = sbr.rel (%p235) target = $region32
        $region31: #{tpu_custom_call.1} parent=11 // pred_region
          _
        $region32: #{tpu_custom_call.1} parent=11 // pred_fallthru
          _
        // Predicated region
        $region33: #{tpu_custom_call.1} parent=11 // pred_check
          %p238 = pneg %p174
        $region34: #{tpu_custom_call.1} parent=11 // pred_check_branch
          %240 = sbr.rel (%p238) target = $region36
        $region35: #{tpu_custom_call.1} parent=11 // pred_region
          _
        $region36: #{tpu_custom_call.1} parent=11 // pred_fallthru
          _
      $region12: #{tpu_custom_call.1} parent=5 // pred_fallthru
        _
      %p241 = scmp.lt.s32.totalorder %s22, 2
      // Predicated region
      $region37: #{tpu_custom_call.1} parent=5 // pred_check
        %p242 = pneg %p241
      $region38: #{tpu_custom_call.1} parent=5 // pred_check_branch
        %244 = sbr.rel (%p242) target = $region40
      $region39: #{tpu_custom_call.1} parent=5 // pred_region
        // Predicated region
        $region41: #{tpu_custom_call.1} parent=39 // pred_check
          %p245 = pneg %p42
        $region42: #{tpu_custom_call.1} parent=39 // pred_check_branch
          %247 = sbr.rel (%p245) target = $region44
        $region43: #{tpu_custom_call.1} parent=39 // pred_region
          %s248 = sand.u32 %s32, 1
          %s249 = scalar_lea.sflag [#allocation4], %s248
          %s250 = sand.u32 %s32, 1
          %s251 = smul.addr %s250, 24
          %s252 = scalar_lea.vmem [#allocation3], %s251
          %s254 = ssub.s32 384, 384
          %255 = vsyncadd %s249, %s254
          %s256 = smul.addr %s22, 3
          %s257 = smul.addr %s256, 128
          %s258 = scalar_lea.hbm %s0, %s257
          %s260 = sshll.u32 %s252, 4
          %s261 = int_to_ptr.vmem [resolvable:$true] %s260
          %263 = dma.hbm_to_vmem [thread:$0]  %s258, 384, %s261, %s249
        $region44: #{tpu_custom_call.1} parent=39 // pred_fallthru
          _
      $region40: #{tpu_custom_call.1} parent=5 // pred_fallthru
        _
      %p264 = scmp.le.s32.totalorder 1, %s22
      %p265 = scmp.lt.s32.totalorder %s22, 3
      %p266 = pnand %p264, %p265
      %p267 = pneg %p266
      // Predicated region
      $region45: #{tpu_custom_call.1} parent=5 // pred_check
        _
      $region46: #{tpu_custom_call.1} parent=5 // pred_check_branch
        %269 = sbr.rel (%p266) target = $region48
      $region47: #{tpu_custom_call.1} parent=5 // pred_region
        %s270 = ssub.s32 %s22, 1
        %s271 = sand.u32 %s35, 1
        %s272 = scalar_lea.sflag [#allocation4], %s271
        %s273 = sand.u32 %s35, 1
        %s274 = smul.addr %s273, 24
        %s275 = scalar_lea.vmem [#allocation3], %s274
        // Predicated region
        $region49: #{tpu_custom_call.1} parent=47 // pred_check
          %p276 = pneg %p48
        $region50: #{tpu_custom_call.1} parent=47 // pred_check_branch
          %278 = sbr.rel (%p276) target = $region52
        $region51: #{tpu_custom_call.1} parent=47 // pred_region
          %279 = dma.done %s272, 384
        $region52: #{tpu_custom_call.1} parent=47 // pred_fallthru
          _
        // Predicated region
        $region53: #{tpu_custom_call.1} parent=47 // pred_check
          %p280 = pneg %p69
        $region54: #{tpu_custom_call.1} parent=47 // pred_check_branch
          %282 = sbr.rel (%p280) target = $region56
        $region55: #{tpu_custom_call.1} parent=47 // pred_region
          %283 = dma.done [#allocation7], 48
        $region56: #{tpu_custom_call.1} parent=47 // pred_fallthru
          _
        %s284 = sand.u32 %s35, 1
        %s285 = scalar_lea.sflag [#allocation4], %s284
        %s286 = sand.u32 %s35, 1
        %s287 = smul.addr %s286, 24
        %s288 = scalar_lea.vmem [#allocation3], %s287
        %p289 = pneg %p48
        %p290 = pneg %p45
        %p291 = pneg %p69
        %p292 = pneg %p66
        %p293 = pneg %p90
        %p294 = pneg %p87
        %p295 = pneg %p111
        %p296 = pneg %p108
        %p297 = pneg %p132
        %p298 = pneg %p129
        %p299 = pneg %p153
        %p300 = pneg %p150
        %p301 = pneg %p174
        %p302 = pneg %p171
        %p303 = pneg %p200
        %p304 = pneg %p197
        %s305 = sand.u32 %s187, 1
        %s306 = scalar_lea.sflag [#allocation5], %s305
        %s307 = sand.u32 %s187, 1
        %s308 = smul.addr %s307, 24
        %s309 = scalar_lea.vmem [#allocation8], %s308
        %v310 = vld [vmem:[%s275] sm:$0xff]
        %v311 = vld [vmem:[%s275 + $0x8] sm:$0xff]
        %v312 = vld [vmem:[%s275 + $0x10] sm:$0xff]
        %v313 = vld [vmem:[%s2] sm:$0xff]
        %v314 = vld [vmem:[%s2 + $0x8] sm:$0xff]
        %v315 = vld [vmem:[%s3] sm:$0xff]
        %v316 = vld [vmem:[%s3 + $0x8] sm:$0xff]
        %317 = vrot.lane.b32.xlu0 %v310, 19
        %v318 = vpop.permute.xlu0 %317
        %319 = vrot.lane.b32.xlu0 %v311, 19
        %v320 = vpop.permute.xlu0 %319
        %321 = vrot.lane.b32.xlu0 %v312, 19
        %v322 = vpop.permute.xlu0 %321
        %v323 = vlaneseq
        %v324 = vand.u32 %v323, 127
        %vm325 = vcmp.lt.s32.totalorder %v324, 19
        %v326 = vsel %vm325, %v320, %v322
        %v327 = vsel %vm325, %v318, %v320
        %v328 = vsel %vm325, %v322, %v318
        %329 = vrot.lane.b32.xlu0 %v310, 18
        %v330 = vpop.permute.xlu0 %329
        %331 = vrot.lane.b32.xlu0 %v311, 18
        %v332 = vpop.permute.xlu0 %331
        %333 = vrot.lane.b32.xlu0 %v312, 18
        %v334 = vpop.permute.xlu0 %333
        %vm335 = vcmp.lt.s32.totalorder %v324, 18
        %v336 = vsel %vm335, %v332, %v334
        %v337 = vsel %vm335, %v330, %v332
        %v338 = vsel %vm335, %v334, %v330
        %339 = vrot.lane.b32.xlu0 %v310, 17
        %v340 = vpop.permute.xlu0 %339
        %341 = vrot.lane.b32.xlu0 %v311, 17
        %v342 = vpop.permute.xlu0 %341
        %343 = vrot.lane.b32.xlu0 %v312, 17
        %v344 = vpop.permute.xlu0 %343
        %vm345 = vcmp.lt.s32.totalorder %v324, 17
        %v346 = vsel %vm345, %v342, %v344
        %v347 = vsel %vm345, %v340, %v342
        %v348 = vsel %vm345, %v344, %v340
        %349 = vrot.lane.b32.xlu0 %v310, 1
        %v350 = vpop.permute.xlu0 %349
        %351 = vrot.lane.b32.xlu0 %v311, 1
        %v352 = vpop.permute.xlu0 %351
        %353 = vrot.lane.b32.xlu0 %v312, 1
        %v354 = vpop.permute.xlu0 %353
        %vm355 = vcmp.lt.s32.totalorder %v324, 1
        %v356 = vsel %vm355, %v352, %v354
        %v357 = vsel %vm355, %v350, %v352
        %v358 = vsel %vm355, %v354, %v350
        %359 = vrot.lane.b32.xlu0 %v310, 127
        %v360 = vpop.permute.xlu0 %359
        %361 = vrot.lane.b32.xlu0 %v311, 127
        %v362 = vpop.permute.xlu0 %361
        %363 = vrot.lane.b32.xlu0 %v312, 127
        %v364 = vpop.permute.xlu0 %363
        %vm365 = vcmp.lt.s32.totalorder %v324, 127
        %v366 = vsel %vm365, %v362, %v364
        %v367 = vsel %vm365, %v360, %v362
        %v368 = vsel %vm365, %v364, %v360
        %369 = vrot.lane.b32.xlu0 %v310, 111
        %v370 = vpop.permute.xlu0 %369
        %371 = vrot.lane.b32.xlu0 %v311, 111
        %v372 = vpop.permute.xlu0 %371
        %373 = vrot.lane.b32.xlu0 %v312, 111
        %v374 = vpop.permute.xlu0 %373
        %vm375 = vcmp.lt.s32.totalorder %v324, 111
        %v376 = vsel %vm375, %v372, %v374
        %v377 = vsel %vm375, %v370, %v372
        %v378 = vsel %vm375, %v374, %v370
        %379 = vrot.lane.b32.xlu0 %v310, 110
        %v380 = vpop.permute.xlu0 %379
        %381 = vrot.lane.b32.xlu0 %v311, 110
        %v382 = vpop.permute.xlu0 %381
        %383 = vrot.lane.b32.xlu0 %v312, 110
        %v384 = vpop.permute.xlu0 %383
        %vm385 = vcmp.lt.s32.totalorder %v324, 110
        %v386 = vsel %vm385, %v382, %v384
        %v387 = vsel %vm385, %v380, %v382
        %v388 = vsel %vm385, %v384, %v380
        %389 = vrot.lane.b32.xlu0 %v310, 109
        %v390 = vpop.permute.xlu0 %389
        %391 = vrot.lane.b32.xlu0 %v311, 109
        %v392 = vpop.permute.xlu0 %391
        %393 = vrot.lane.b32.xlu0 %v312, 109
        %v394 = vpop.permute.xlu0 %393
        %vm395 = vcmp.lt.s32.totalorder %v324, 109
        %v396 = vsel %vm395, %v392, %v394
        %v397 = vsel %vm395, %v390, %v392
        %v398 = vsel %vm395, %v394, %v390
        %400 = vset.pattern.permute.xlu0 0
        %401 = vperm.xlu0 %400, %v315
        %v402 = vpop.permute.xlu0 %401
        %405 = vset.pattern.permute.xlu0 0
        %406 = vperm.xlu0 %405, %v316
        %v407 = vpop.permute.xlu0 %406
        %vm409 = vcmask 588800
        %v411 = vsel %vm409, %v313, 0
        %v414 = vsel %vm409, %v314, 0
        %416 = vmatprep.subr.mxu0 0.0
        %417 = vmatpush1.msra.mxu0 0.0
        %418 = vmatprep.subr.mxu0 0.0
        %419 = vmatpush1.msra.mxu0 0.0
        %420 = vmatprep.subr.mxu0 0.0
        %421 = vmatpush1.msra.mxu0 0.0
        %422 = vmatprep.subr.mxu0 0.0
        %423 = vmatpush1.msra.mxu0 0.0
        %424 = vmatprep.subr.mxu0 0.0
        %425 = vmatpush1.msra.mxu0 0.0
        %426 = vmatprep.subr.mxu0 0.0
        %427 = vmatpush1.msra.mxu0 0.0
        %428 = vmatprep.subr.mxu0 0.0
        %429 = vmatpush1.msra.mxu0 0.0
        %430 = vmatprep.subr.mxu0 %v396
        %431 = vmatpush1.msra.mxu0 %v397
        %432 = vmatprep.subr.mxu0 %v386
        %433 = vmatpush1.msra.mxu0 %v387
        %434 = vmatprep.subr.mxu0 %v376
        %435 = vmatpush1.msra.mxu0 %v377
        %436 = vmatprep.subr.mxu0 %v366
        %437 = vmatpush1.msra.mxu0 %v367
        %438 = vmatprep.subr.mxu0 %v311
        %439 = vmatpush1.msra.mxu0 %v310
        %440 = vmatprep.subr.mxu0 %v357
        %441 = vmatpush1.msra.mxu0 %v358
        %442 = vmatprep.subr.mxu0 %v347
        %443 = vmatpush1.msra.mxu0 %v348
        %444 = vmatprep.subr.mxu0 %v337
        %445 = vmatpush1.msra.mxu0 %v338
        %446 = vmatprep.subr.mxu0 %v327
        %447 = vmatpush1.msra.mxu0 %v328
        %448 = vmatprep.subr.mxu0 0.0
        %449 = vmatpush2.msra.mxu0 0.0
        %450 = vmatprep.subr.mxu0 0.0
        %451 = vmatpush2.msra.mxu0 0.0
        %452 = vmatprep.subr.mxu0 0.0
        %453 = vmatpush2.msra.mxu0 0.0
        %454 = vmatprep.subr.mxu0 0.0
        %455 = vmatpush2.msra.mxu0 0.0
        %456 = vmatprep.subr.mxu0 0.0
        %457 = vmatpush2.msra.mxu0 0.0
        %458 = vmatprep.subr.mxu0 0.0
        %459 = vmatpush2.msra.mxu0 0.0
        %460 = vmatprep.subr.mxu0 0.0
        %461 = vmatpush2.msra.mxu0 0.0
        %462 = vmatprep.subr.mxu0 0.0
        %463 = vmatpush2.msra.mxu0 0.0
        %464 = vmatprep.subr.mxu0 0.0
        %465 = vmatpush2.msra.mxu0 0.0
        %466 = vmatprep.subr.mxu0 0.0
        %467 = vmatpush2.msra.mxu0 0.0
        %468 = vmatprep.subr.mxu0 0.0
        %469 = vmatpush2.msra.mxu0 0.0
        %470 = vmatprep.subr.mxu0 0.0
        %471 = vmatpush2.msra.mxu0 0.0
        %472 = vmatprep.subr.mxu0 0.0
        %473 = vmatpush2.msra.mxu0 0.0
        %474 = vmatprep.subr.mxu0 0.0
        %475 = vmatpush2.msra.mxu0 0.0
        %476 = vmatprep.subr.mxu0 0.0
        %477 = vmatpush2.msra.mxu0 0.0
        %478 = vmatprep.subr.mxu0 0.0
        %479 = vmatpush2.msra.mxu0 0.0
        %480 = vmatprep.mubr.f32.mxu0 0.0
        %481 = vmatmul.mubr.f32.gmra.mxu0 %v411
        %v482 = vpop.f32.mrf.mxu0
        %v483 = vadd.f32 %v402, %v482
        %v484 = vpop.f32.mrf.mxu0
        %v485 = vadd.f32 %v402, %v484
        %486 = vmatprep.mubr.f32.mxu0 0.0
        %487 = vmatmul.mubr.f32.gmra.mxu0 %v414
        %v488 = vpop.f32.mrf.mxu0
        %v489 = vadd.f32 %v407, %v488
        %v490 = vpop.f32.mrf.mxu0
        %v491 = vadd.f32 %v407, %v490
        %492 = vdwg.mxu0
        %493 = vmatprep.subr.mxu0 0.0
        %494 = vmatpush1.msra.mxu0 0.0
        %495 = vmatprep.subr.mxu0 0.0
        %496 = vmatpush1.msra.mxu0 0.0
        %497 = vmatprep.subr.mxu0 0.0
        %498 = vmatpush1.msra.mxu0 0.0
        %499 = vmatprep.subr.mxu0 0.0
        %500 = vmatpush1.msra.mxu0 0.0
        %501 = vmatprep.subr.mxu0 0.0
        %502 = vmatpush1.msra.mxu0 0.0
        %503 = vmatprep.subr.mxu0 0.0
        %504 = vmatpush1.msra.mxu0 0.0
        %505 = vmatprep.subr.mxu0 0.0
        %506 = vmatpush1.msra.mxu0 0.0
        %507 = vmatprep.subr.mxu0 0.0
        %508 = vmatpush1.msra.mxu0 %v398
        %509 = vmatprep.subr.mxu0 0.0
        %510 = vmatpush1.msra.mxu0 %v388
        %511 = vmatprep.subr.mxu0 0.0
        %512 = vmatpush1.msra.mxu0 %v378
        %513 = vmatprep.subr.mxu0 0.0
        %514 = vmatpush1.msra.mxu0 %v368
        %515 = vmatprep.subr.mxu0 0.0
        %516 = vmatpush1.msra.mxu0 %v312
        %517 = vmatprep.subr.mxu0 0.0
        %518 = vmatpush1.msra.mxu0 %v356
        %519 = vmatprep.subr.mxu0 0.0
        %520 = vmatpush1.msra.mxu0 %v346
        %521 = vmatprep.subr.mxu0 0.0
        %522 = vmatpush1.msra.mxu0 %v336
        %523 = vmatprep.subr.mxu0 0.0
        %524 = vmatpush1.msra.mxu0 %v326
        %525 = vmatprep.subr.mxu0 0.0
        %526 = vmatpush2.msra.mxu0 0.0
        %527 = vmatprep.subr.mxu0 0.0
        %528 = vmatpush2.msra.mxu0 0.0
        %529 = vmatprep.subr.mxu0 0.0
        %530 = vmatpush2.msra.mxu0 0.0
        %531 = vmatprep.subr.mxu0 0.0
        %532 = vmatpush2.msra.mxu0 0.0
        %533 = vmatprep.subr.mxu0 0.0
        %534 = vmatpush2.msra.mxu0 0.0
        %535 = vmatprep.subr.mxu0 0.0
        %536 = vmatpush2.msra.mxu0 0.0
        %537 = vmatprep.subr.mxu0 0.0
        %538 = vmatpush2.msra.mxu0 0.0
        %539 = vmatprep.subr.mxu0 0.0
        %540 = vmatpush2.msra.mxu0 0.0
        %541 = vmatprep.subr.mxu0 0.0
        %542 = vmatpush2.msra.mxu0 0.0
        %543 = vmatprep.subr.mxu0 0.0
        %544 = vmatpush2.msra.mxu0 0.0
        %545 = vmatprep.subr.mxu0 0.0
        %546 = vmatpush2.msra.mxu0 0.0
        %547 = vmatprep.subr.mxu0 0.0
        %548 = vmatpush2.msra.mxu0 0.0
        %549 = vmatprep.subr.mxu0 0.0
        %550 = vmatpush2.msra.mxu0 0.0
        %551 = vmatprep.subr.mxu0 0.0
        %552 = vmatpush2.msra.mxu0 0.0
        %553 = vmatprep.subr.mxu0 0.0
        %554 = vmatpush2.msra.mxu0 0.0
        %555 = vmatprep.subr.mxu0 0.0
        %556 = vmatpush2.msra.mxu0 0.0
        %557 = vmatprep.mubr.f32.mxu0 0.0
        %558 = vmatmul.mubr.f32.gmra.mxu0 %v411
        %v559 = vpop.f32.mrf.mxu0
        %v560 = vadd.f32 %v402, %v559
        %v561 = vpop.f32.mrf.mxu0
        %562 = vmatprep.mubr.f32.mxu0 0.0
        %563 = vmatmul.mubr.f32.gmra.mxu0 %v414
        %v564 = vpop.f32.mrf.mxu0
        %v565 = vadd.f32 %v407, %v564
        %v566 = vpop.f32.mrf.mxu0
        %567 = vdwg.mxu0
        %vm568 = vcmp.ge.f32.partialorder %v483, 0.0
        %vm569 = vcmp.ge.f32.partialorder %v485, 0.0
        %vm570 = vcmp.ge.f32.partialorder %v560, 0.0
        %vm571 = vcmp.ge.f32.partialorder %v489, 0.0
        %vm572 = vcmp.ge.f32.partialorder %v491, 0.0
        %vm573 = vcmp.ge.f32.partialorder %v565, 0.0
        %v574 = vld [vmem:[#allocation2] sm:$0x1]
        %v576 = vlaneseq
        %v577 = vshrl.u32 %v576, 7
        %v578 = vsub.s32 0, %v577
        %v579 = vrot.slane %v574, %v578
        %580 = vset.pattern.permute.xlu0 0
        %581 = vperm.xlu0 %580, %v579
        %v582 = vpop.permute.xlu0 %581
        %v584 = vmul.f32 %v582, %v483
        %v585 = vmul.f32 %v582, %v485
        %v586 = vmul.f32 %v582, %v560
        %v587 = vmul.f32 %v582, %v489
        %v588 = vmul.f32 %v582, %v491
        %v589 = vmul.f32 %v582, %v565
        %v590 = vsel %vm568, %v483, %v584
        %v591 = vsel %vm569, %v485, %v585
        %v592 = vsel %vm570, %v560, %v586
        %v593 = vsel %vm571, %v489, %v587
        %v594 = vsel %vm572, %v491, %v588
        %v595 = vsel %vm573, %v565, %v589
        %v596 = vld [vmem:[#allocation6] sm:$0x7]
        %v598 = vlaneseq
        %v599 = vshrl.u32 %v598, 7
        %v600 = vsub.s32 0, %v599
        %v601 = vrot.slane %v596, %v600
        %v602 = vlaneseq
        %v603 = vshrl.u32 %v602, 7
        %v604 = vsub.s32 1, %v603
        %v605 = vrot.slane %v596, %v604
        %v606 = vlaneseq
        %v607 = vshrl.u32 %v606, 7
        %v608 = vsub.s32 2, %v607
        %v609 = vrot.slane %v596, %v608
        %v613 = vmul.f32 %v590, %v601
        %v614 = vmul.f32 %v591, %v605
        %v615 = vmul.f32 %v592, %v609
        %v616 = vmul.f32 %v593, %v601
        %v617 = vmul.f32 %v594, %v605
        %v618 = vmul.f32 %v595, %v609
        %v619 = vld [vmem:[%s4] sm:$0xff]
        %v620 = vld [vmem:[%s4 + $0x8] sm:$0xff]
        %v621 = vld [vmem:[%s5] sm:$0xff]
        %622 = vrot.lane.b32.xlu0 %v613, 19
        %v623 = vpop.permute.xlu0 %622
        %624 = vrot.lane.b32.xlu0 %v616, 19
        %v625 = vpop.permute.xlu0 %624
        %626 = vrot.lane.b32.xlu0 %v614, 19
        %v627 = vpop.permute.xlu0 %626
        %628 = vrot.lane.b32.xlu0 %v617, 19
        %v629 = vpop.permute.xlu0 %628
        %630 = vrot.lane.b32.xlu0 %v615, 19
        %v631 = vpop.permute.xlu0 %630
        %632 = vrot.lane.b32.xlu0 %v618, 19
        %v633 = vpop.permute.xlu0 %632
        %v634 = vsel %vm325, %v627, %v631
        %v635 = vsel %vm325, %v629, %v633
        %v636 = vsel %vm325, %v623, %v627
        %v637 = vsel %vm325, %v625, %v629
        %v638 = vsel %vm325, %v631, %v623
        %v639 = vsel %vm325, %v633, %v625
        %640 = vrot.lane.b32.xlu0 %v613, 18
        %v641 = vpop.permute.xlu0 %640
        %642 = vrot.lane.b32.xlu0 %v616, 18
        %v643 = vpop.permute.xlu0 %642
        %644 = vrot.lane.b32.xlu0 %v614, 18
        %v645 = vpop.permute.xlu0 %644
        %646 = vrot.lane.b32.xlu0 %v617, 18
        %v647 = vpop.permute.xlu0 %646
        %648 = vrot.lane.b32.xlu0 %v615, 18
        %v649 = vpop.permute.xlu0 %648
        %650 = vrot.lane.b32.xlu0 %v618, 18
        %v651 = vpop.permute.xlu0 %650
        %v652 = vsel %vm335, %v645, %v649
        %v653 = vsel %vm335, %v647, %v651
        %v654 = vsel %vm335, %v641, %v645
        %v655 = vsel %vm335, %v643, %v647
        %v656 = vsel %vm335, %v649, %v641
        %v657 = vsel %vm335, %v651, %v643
        %658 = vrot.lane.b32.xlu0 %v613, 17
        %v659 = vpop.permute.xlu0 %658
        %660 = vrot.lane.b32.xlu0 %v616, 17
        %v661 = vpop.permute.xlu0 %660
        %662 = vrot.lane.b32.xlu0 %v614, 17
        %v663 = vpop.permute.xlu0 %662
        %664 = vrot.lane.b32.xlu0 %v617, 17
        %v665 = vpop.permute.xlu0 %664
        %666 = vrot.lane.b32.xlu0 %v615, 17
        %v667 = vpop.permute.xlu0 %666
        %668 = vrot.lane.b32.xlu0 %v618, 17
        %v669 = vpop.permute.xlu0 %668
        %v670 = vsel %vm345, %v663, %v667
        %v671 = vsel %vm345, %v665, %v669
        %v672 = vsel %vm345, %v659, %v663
        %v673 = vsel %vm345, %v661, %v665
        %v674 = vsel %vm345, %v667, %v659
        %v675 = vsel %vm345, %v669, %v661
        %676 = vrot.lane.b32.xlu0 %v613, 1
        %v677 = vpop.permute.xlu0 %676
        %678 = vrot.lane.b32.xlu0 %v616, 1
        %v679 = vpop.permute.xlu0 %678
        %680 = vrot.lane.b32.xlu0 %v614, 1
        %v681 = vpop.permute.xlu0 %680
        %682 = vrot.lane.b32.xlu0 %v617, 1
        %v683 = vpop.permute.xlu0 %682
        %684 = vrot.lane.b32.xlu0 %v615, 1
        %v685 = vpop.permute.xlu0 %684
        %686 = vrot.lane.b32.xlu0 %v618, 1
        %v687 = vpop.permute.xlu0 %686
        %v688 = vsel %vm355, %v681, %v685
        %v689 = vsel %vm355, %v683, %v687
        %v690 = vsel %vm355, %v677, %v681
        %v691 = vsel %vm355, %v679, %v683
        %v692 = vsel %vm355, %v685, %v677
        %v693 = vsel %vm355, %v687, %v679
        %694 = vrot.lane.b32.xlu0 %v613, 127
        %v695 = vpop.permute.xlu0 %694
        %696 = vrot.lane.b32.xlu0 %v616, 127
        %v697 = vpop.permute.xlu0 %696
        %698 = vrot.lane.b32.xlu0 %v614, 127
        %v699 = vpop.permute.xlu0 %698
        %700 = vrot.lane.b32.xlu0 %v617, 127
        %v701 = vpop.permute.xlu0 %700
        %702 = vrot.lane.b32.xlu0 %v615, 127
        %v703 = vpop.permute.xlu0 %702
        %704 = vrot.lane.b32.xlu0 %v618, 127
        %v705 = vpop.permute.xlu0 %704
        %v706 = vsel %vm365, %v699, %v703
        %v707 = vsel %vm365, %v701, %v705
        %v708 = vsel %vm365, %v695, %v699
        %v709 = vsel %vm365, %v697, %v701
        %v710 = vsel %vm365, %v703, %v695
        %v711 = vsel %vm365, %v705, %v697
        %712 = vrot.lane.b32.xlu0 %v613, 111
        %v713 = vpop.permute.xlu0 %712
        %714 = vrot.lane.b32.xlu0 %v616, 111
        %v715 = vpop.permute.xlu0 %714
        %716 = vrot.lane.b32.xlu0 %v614, 111
        %v717 = vpop.permute.xlu0 %716
        %718 = vrot.lane.b32.xlu0 %v617, 111
        %v719 = vpop.permute.xlu0 %718
        %720 = vrot.lane.b32.xlu0 %v615, 111
        %v721 = vpop.permute.xlu0 %720
        %722 = vrot.lane.b32.xlu0 %v618, 111
        %v723 = vpop.permute.xlu0 %722
        %v724 = vsel %vm375, %v717, %v721
        %v725 = vsel %vm375, %v719, %v723
        %v726 = vsel %vm375, %v713, %v717
        %v727 = vsel %vm375, %v715, %v719
        %v728 = vsel %vm375, %v721, %v713
        %v729 = vsel %vm375, %v723, %v715
        %730 = vrot.lane.b32.xlu0 %v613, 110
        %v731 = vpop.permute.xlu0 %730
        %732 = vrot.lane.b32.xlu0 %v616, 110
        %v733 = vpop.permute.xlu0 %732
        %734 = vrot.lane.b32.xlu0 %v614, 110
        %v735 = vpop.permute.xlu0 %734
        %736 = vrot.lane.b32.xlu0 %v617, 110
        %v737 = vpop.permute.xlu0 %736
        %738 = vrot.lane.b32.xlu0 %v615, 110
        %v739 = vpop.permute.xlu0 %738
        %740 = vrot.lane.b32.xlu0 %v618, 110
        %v741 = vpop.permute.xlu0 %740
        %v742 = vsel %vm385, %v735, %v739
        %v743 = vsel %vm385, %v737, %v741
        %v744 = vsel %vm385, %v731, %v735
        %v745 = vsel %vm385, %v733, %v737
        %v746 = vsel %vm385, %v739, %v731
        %v747 = vsel %vm385, %v741, %v733
        %748 = vrot.lane.b32.xlu0 %v613, 109
        %v749 = vpop.permute.xlu0 %748
        %750 = vrot.lane.b32.xlu0 %v616, 109
        %v751 = vpop.permute.xlu0 %750
        %752 = vrot.lane.b32.xlu0 %v614, 109
        %v753 = vpop.permute.xlu0 %752
        %754 = vrot.lane.b32.xlu0 %v617, 109
        %v755 = vpop.permute.xlu0 %754
        %756 = vrot.lane.b32.xlu0 %v615, 109
        %v757 = vpop.permute.xlu0 %756
        %758 = vrot.lane.b32.xlu0 %v618, 109
        %v759 = vpop.permute.xlu0 %758
        %v760 = vsel %vm395, %v753, %v757
        %v761 = vsel %vm395, %v755, %v759
        %v762 = vsel %vm395, %v749, %v753
        %v763 = vsel %vm395, %v751, %v755
        %v764 = vsel %vm395, %v757, %v749
        %v765 = vsel %vm395, %v759, %v751
        %767 = vset.pattern.permute.xlu0 0
        %768 = vperm.xlu0 %767, %v621
        %v769 = vpop.permute.xlu0 %768
        %vm771 = vcmask 130048
        %v773 = vsel %vm771, %v620, 0
        %775 = vmatprep.subr.mxu0 %v743
        %776 = vmatpush1.msra.mxu0 %v745
        %777 = vmatprep.subr.mxu0 %v742
        %778 = vmatpush1.msra.mxu0 %v744
        %779 = vmatprep.subr.mxu0 %v725
        %780 = vmatpush1.msra.mxu0 %v727
        %781 = vmatprep.subr.mxu0 %v724
        %782 = vmatpush1.msra.mxu0 %v726
        %783 = vmatprep.subr.mxu0 %v707
        %784 = vmatpush1.msra.mxu0 %v709
        %785 = vmatprep.subr.mxu0 %v706
        %786 = vmatpush1.msra.mxu0 %v708
        %787 = vmatprep.subr.mxu0 %v617
        %788 = vmatpush1.msra.mxu0 %v616
        %789 = vmatprep.subr.mxu0 %v614
        %790 = vmatpush1.msra.mxu0 %v613
        %791 = vmatprep.subr.mxu0 %v691
        %792 = vmatpush1.msra.mxu0 %v693
        %793 = vmatprep.subr.mxu0 %v690
        %794 = vmatpush1.msra.mxu0 %v692
        %795 = vmatprep.subr.mxu0 %v673
        %796 = vmatpush1.msra.mxu0 %v675
        %797 = vmatprep.subr.mxu0 %v672
        %798 = vmatpush1.msra.mxu0 %v674
        %799 = vmatprep.subr.mxu0 %v655
        %800 = vmatpush1.msra.mxu0 %v657
        %801 = vmatprep.subr.mxu0 %v654
        %802 = vmatpush1.msra.mxu0 %v656
        %803 = vmatprep.subr.mxu0 %v637
        %804 = vmatpush1.msra.mxu0 %v639
        %805 = vmatprep.subr.mxu0 %v636
        %806 = vmatpush1.msra.mxu0 %v638
        %807 = vmatprep.subr.mxu0 0.0
        %808 = vmatpush2.msra.mxu0 0.0
        %809 = vmatprep.subr.mxu0 0.0
        %810 = vmatpush2.msra.mxu0 0.0
        %811 = vmatprep.subr.mxu0 0.0
        %812 = vmatpush2.msra.mxu0 0.0
        %813 = vmatprep.subr.mxu0 0.0
        %814 = vmatpush2.msra.mxu0 0.0
        %815 = vmatprep.subr.mxu0 0.0
        %816 = vmatpush2.msra.mxu0 0.0
        %817 = vmatprep.subr.mxu0 0.0
        %818 = vmatpush2.msra.mxu0 0.0
        %819 = vmatprep.subr.mxu0 0.0
        %820 = vmatpush2.msra.mxu0 0.0
        %821 = vmatprep.subr.mxu0 0.0
        %822 = vmatpush2.msra.mxu0 0.0
        %823 = vmatprep.subr.mxu0 0.0
        %824 = vmatpush2.msra.mxu0 0.0
        %825 = vmatprep.subr.mxu0 0.0
        %826 = vmatpush2.msra.mxu0 0.0
        %827 = vmatprep.subr.mxu0 0.0
        %828 = vmatpush2.msra.mxu0 0.0
        %829 = vmatprep.subr.mxu0 0.0
        %830 = vmatpush2.msra.mxu0 0.0
        %831 = vmatprep.subr.mxu0 0.0
        %832 = vmatpush2.msra.mxu0 0.0
        %833 = vmatprep.subr.mxu0 0.0
        %834 = vmatpush2.msra.mxu0 0.0
        %835 = vmatprep.subr.mxu0 %v761
        %836 = vmatpush2.msra.mxu0 %v763
        %837 = vmatprep.subr.mxu0 %v760
        %838 = vmatpush2.msra.mxu0 %v762
        %839 = vmatprep.mubr.f32.mxu0 %v773
        %840 = vmatmul.mubr.f32.gmra.mxu0 %v619
        %v841 = vpop.f32.mrf.mxu0
        %v842 = vadd.f32 %v769, %v841
        %v843 = vpop.f32.mrf.mxu0
        %v844 = vadd.f32 %v769, %v843
        %845 = vdwg.mxu0
        %846 = vmatprep.subr.mxu0 0.0
        %847 = vmatpush1.msra.mxu0 %v747
        %848 = vmatprep.subr.mxu0 0.0
        %849 = vmatpush1.msra.mxu0 %v746
        %850 = vmatprep.subr.mxu0 0.0
        %851 = vmatpush1.msra.mxu0 %v729
        %852 = vmatprep.subr.mxu0 0.0
        %853 = vmatpush1.msra.mxu0 %v728
        %854 = vmatprep.subr.mxu0 0.0
        %855 = vmatpush1.msra.mxu0 %v711
        %856 = vmatprep.subr.mxu0 0.0
        %857 = vmatpush1.msra.mxu0 %v710
        %858 = vmatprep.subr.mxu0 0.0
        %859 = vmatpush1.msra.mxu0 %v618
        %860 = vmatprep.subr.mxu0 0.0
        %861 = vmatpush1.msra.mxu0 %v615
        %862 = vmatprep.subr.mxu0 0.0
        %863 = vmatpush1.msra.mxu0 %v689
        %864 = vmatprep.subr.mxu0 0.0
        %865 = vmatpush1.msra.mxu0 %v688
        %866 = vmatprep.subr.mxu0 0.0
        %867 = vmatpush1.msra.mxu0 %v671
        %868 = vmatprep.subr.mxu0 0.0
        %869 = vmatpush1.msra.mxu0 %v670
        %870 = vmatprep.subr.mxu0 0.0
        %871 = vmatpush1.msra.mxu0 %v653
        %872 = vmatprep.subr.mxu0 0.0
        %873 = vmatpush1.msra.mxu0 %v652
        %874 = vmatprep.subr.mxu0 0.0
        %875 = vmatpush1.msra.mxu0 %v635
        %876 = vmatprep.subr.mxu0 0.0
        %877 = vmatpush1.msra.mxu0 %v634
        %878 = vmatprep.subr.mxu0 0.0
        %879 = vmatpush2.msra.mxu0 0.0
        %880 = vmatprep.subr.mxu0 0.0
        %881 = vmatpush2.msra.mxu0 0.0
        %882 = vmatprep.subr.mxu0 0.0
        %883 = vmatpush2.msra.mxu0 0.0
        %884 = vmatprep.subr.mxu0 0.0
        %885 = vmatpush2.msra.mxu0 0.0
        %886 = vmatprep.subr.mxu0 0.0
        %887 = vmatpush2.msra.mxu0 0.0
        %888 = vmatprep.subr.mxu0 0.0
        %889 = vmatpush2.msra.mxu0 0.0
        %890 = vmatprep.subr.mxu0 0.0
        %891 = vmatpush2.msra.mxu0 0.0
        %892 = vmatprep.subr.mxu0 0.0
        %893 = vmatpush2.msra.mxu0 0.0
        %894 = vmatprep.subr.mxu0 0.0
        %895 = vmatpush2.msra.mxu0 0.0
        %896 = vmatprep.subr.mxu0 0.0
        %897 = vmatpush2.msra.mxu0 0.0
        %898 = vmatprep.subr.mxu0 0.0
        %899 = vmatpush2.msra.mxu0 0.0
        %900 = vmatprep.subr.mxu0 0.0
        %901 = vmatpush2.msra.mxu0 0.0
        %902 = vmatprep.subr.mxu0 0.0
        %903 = vmatpush2.msra.mxu0 0.0
        %904 = vmatprep.subr.mxu0 0.0
        %905 = vmatpush2.msra.mxu0 0.0
        %906 = vmatprep.subr.mxu0 0.0
        %907 = vmatpush2.msra.mxu0 %v765
        %908 = vmatprep.subr.mxu0 0.0
        %909 = vmatpush2.msra.mxu0 %v764
        %910 = vmatprep.mubr.f32.mxu0 %v773
        %911 = vmatmul.mubr.f32.gmra.mxu0 %v619
        %v912 = vpop.f32.mrf.mxu0
        %v913 = vadd.f32 %v769, %v912
        %v914 = vpop.f32.mrf.mxu0
        %915 = vdwg.mxu0
        %v916 = vadd.f32 %v310, %v842
        %v917 = vadd.f32 %v311, %v844
        %v918 = vadd.f32 %v312, %v913
        %919 = vst [vmem:[%s309] sm:$0xff] %v916
        %920 = vst [vmem:[%s309 + $0x8] sm:$0xff] %v917
        %921 = vst [vmem:[%s309 + $0x10] sm:$0xff] %v918
        %s922 = sand.u32 %s187, 1
        %s923 = scalar_lea.sflag [#allocation5], %s922
        %s924 = sand.u32 %s187, 1
        %s925 = smul.addr %s924, 24
        %s926 = scalar_lea.vmem [#allocation8], %s925
        // Predicated region
        $region57: #{tpu_custom_call.1} parent=47 // pred_check
          %p927 = pneg %p197
        $region58: #{tpu_custom_call.1} parent=47 // pred_check_branch
          %929 = sbr.rel (%p927) target = $region60
        $region59: #{tpu_custom_call.1} parent=47 // pred_region
          %s931 = ssub.s32 384, 384
          %932 = vsyncadd %s923, %s931
          %s933 = smul.addr %s27, 3
          %s934 = smul.addr %s933, 128
          %s935 = scalar_lea.hbm %s7, %s934
          %s937 = sshll.u32 %s926, 4
          %s938 = int_to_ptr.vmem [resolvable:$true] %s937
          %940 = dma.vmem_to_hbm [thread:$0]  %s938, 384, %s935, %s923
        $region60: #{tpu_custom_call.1} parent=47 // pred_fallthru
          _
      $region48: #{tpu_custom_call.1} parent=5 // pred_fallthru
        _
      %p941 = scmp.le.s32.totalorder 2, %s22
      // Predicated region
      $region61: #{tpu_custom_call.1} parent=5 // pred_check
        %p942 = pneg %p941
      $region62: #{tpu_custom_call.1} parent=5 // pred_check_branch
        %944 = sbr.rel (%p942) target = $region64
      $region63: #{tpu_custom_call.1} parent=5 // pred_region
        %s945 = ssub.s32 %s22, 2
        // Predicated region
        $region65: #{tpu_custom_call.1} parent=63 // pred_check
          %p946 = pneg %p203
        $region66: #{tpu_custom_call.1} parent=63 // pred_check_branch
          %948 = sbr.rel (%p946) target = $region68
        $region67: #{tpu_custom_call.1} parent=63 // pred_region
          %s949 = sand.u32 %s188, 1
          %s950 = scalar_lea.sflag [#allocation5], %s949
          %s951 = sand.u32 %s188, 1
          %s952 = smul.addr %s951, 24
          %s953 = scalar_lea.vmem [#allocation8], %s952
          %954 = dma.done %s950, 384
        $region68: #{tpu_custom_call.1} parent=63 // pred_fallthru
          _
      $region64: #{tpu_custom_call.1} parent=5 // pred_fallthru
        _
    $region6: #{tpu_custom_call.1} parent=1 // loop_footer
      %s26 = sadd.s32 1, %s22
    $region7: #{tpu_custom_call.1} parent=1 // loop_footer_branch
      %21 = sbr.rel target = $region3
    $region8: #{tpu_custom_call.1} parent=1 // loop_exit
      _
    %955 = vsyncpa [#allocation4], 1
    %s956 = scalar_lea.sflag [#allocation4], 1
    %957 = vsyncpa %s956, 1
    %958 = vsyncpa [#allocation7], 1
    %959 = vsyncpa [#allocation5], 1
    %s960 = scalar_lea.sflag [#allocation5], 1
    %961 = vsyncpa %s960, 1

</llo_original>
